<compile_context>
chip_gen: v5e
topology: v5e:2x2
jax: 0.10.0
libtpu: 0.0.40
codegen_flags: <defaults>
</compile_context>

<pallas_src>
import jax
import jax.numpy as jnp
from jax.experimental import pallas as pl
from jax.experimental.pallas import tpu as pltpu


# ----------------------------------------------------------------------------
# Kernels
# ----------------------------------------------------------------------------
def gru_cell_kernel(hx_ref, w_ref, b_ref, out_ref):
    """Single GRU step. hx = [h_pad | x] (B, Hp+K); w (Hp+K, 4*Hp); b (1, 4*Hp)."""
    Hp = out_ref.shape[-1]
    hx = hx_ref[...]
    h = hx[:, :Hp]                                   # tile-aligned slice (Hp % 128 == 0)

    # One fused matmul: columns = [r_pre | z_pre | in(x) | hn(h)]
    pre = jnp.dot(hx, w_ref[...], preferred_element_type=jnp.float32) + b_ref[...]

    r = jax.nn.sigmoid(pre[:, :Hp])
    z = jax.nn.sigmoid(pre[:, Hp:2 * Hp])            # = sigmoid(iz(x) + iz(h))
    n = jnp.tanh(pre[:, 2 * Hp:3 * Hp] + r * pre[:, 3 * Hp:4 * Hp])

    out_ref[...] = (n - z * (n - h)).astype(out_ref.dtype)


def gru_seq_kernel(x_ref, h0_ref, wx_ref, wh_ref, b_ref, out_ref, h_scr):
    """Recurrent loop inside the kernel: weights resident, h carried in scratch."""
    t = pl.program_id(0)
    Hp = out_ref.shape[-1]

    @pl.when(t == 0)
    def _():
        h_scr[...] = h0_ref[...].astype(jnp.float32)

    h = h_scr[...]
    x = x_ref[0]                                     # (B, K) slice of the (1, B, K) block

    pre = (jnp.dot(x, wx_ref[...], preferred_element_type=jnp.float32)
           + jnp.dot(h, wh_ref[...], preferred_element_type=jnp.float32)
           + b_ref[...])

    r = jax.nn.sigmoid(pre[:, :Hp])
    z = jax.nn.sigmoid(pre[:, Hp:2 * Hp])
    n = jnp.tanh(pre[:, 2 * Hp:3 * Hp] + r * pre[:, 3 * Hp:4 * Hp])

    h_new = n - z * (n - h)
    h_scr[...] = h_new
    out_ref[...] = h_new.astype(out_ref.dtype)


# ----------------------------------------------------------------------------
# One-time parameter preparation (outside the per-step path)
# ----------------------------------------------------------------------------
def prepare_gru_params(params, input_size, hidden_size, lane_pad=128):
    """Transpose to (in, out), fuse gates column-wise and zero-pad each gate's
    output block to a multiple of 128 lanes. Done once at load time."""
    H, K = hidden_size, input_size
    Hp = ((H + lane_pad - 1) // lane_pad) * lane_pad

    def wt(name):
        W, b = params[name]
        return W.T.astype(jnp.float32), b.astype(jnp.float32)

    wir, bir = wt("ir")
    whr, bhr = wt("hr")
    wiz, biz = wt("iz")
    win, bin_ = wt("in")
    whn, bhn = wt("hn")

    padc = lambda W: jnp.pad(W, ((0, 0), (0, Hp - H)))      # pad out-columns H -> Hp
    padb = lambda b: jnp.pad(b, (0, Hp - H))

    zeros_x = jnp.zeros((K, Hp), jnp.float32)
    zeros_h = jnp.zeros((H, Hp), jnp.float32)

    # Column groups: [ r | z | in(x) | hn(h) ]   (iz appears in both rows -> quirk)
    wx = jnp.concatenate([padc(wir), padc(wiz), padc(win), zeros_x], axis=1)   # (K, 4Hp)
    wh = jnp.concatenate([padc(whr), padc(wiz), zeros_h, padc(whn)], axis=1)   # (H, 4Hp)
    wh = jnp.pad(wh, ((0, Hp - H), (0, 0)))                                    # (Hp, 4Hp)

    b_fused = jnp.concatenate(
        [padb(bir + bhr), padb(2.0 * biz), padb(bin_), padb(bhn)]
    ).reshape(1, 4 * Hp)

    w_full = jnp.concatenate([wh, wx], axis=0)               # rows: [h_pad ; x] -> (Hp+K, 4Hp)

    return dict(K=K, H=H, Hp=Hp, wx=wx, wh=wh, w_full=w_full, b=b_fused)


# ----------------------------------------------------------------------------
# Wrappers
# ----------------------------------------------------------------------------
def gru_cell(x, h, fused):
    """One GRUCell forward. x: (B, K), h: (B, H)."""
    B = x.shape[0]
    K, H, Hp = fused["K"], fused["H"], fused["Hp"]
    w_full, b = fused["w_full"], fused["b"]

    h_pad = jnp.pad(h.astype(jnp.float32), ((0, 0), (0, Hp - H)))
    hx = jnp.concatenate([h_pad, x.astype(jnp.float32)], axis=1)   # (B, Hp + K)

    full = lambda a: pl.BlockSpec(a.shape, lambda: (0,) * a.ndim)
    args = (hx, w_full, b)

    cost = pl.CostEstimate(
        flops=2 * B * (Hp + K) * 4 * Hp + 10 * B * Hp,
        transcendentals=3 * B * Hp,
        bytes_accessed=4 * (hx.size + w_full.size + b.size + B * Hp),
    )

    out = pl.pallas_call(
        gru_cell_kernel,
        out_shape=jax.ShapeDtypeStruct((B, Hp), jnp.float32),
        grid=(),
        in_specs=[full(a) for a in args],
        out_specs=pl.BlockSpec((B, Hp), lambda: (0, 0)),
        cost_estimate=cost,
    )(*args)
    return out[:, :H].astype(x.dtype)


def gru_sequence(xs, h0, fused):
    """Apply the GRU cell over a time axis inside ONE pallas_call.
    xs: (T, B, K), h0: (B, H) -> final hidden (B, H)."""
    T, B, K = xs.shape
    H, Hp = fused["H"], fused["Hp"]
    wx, wh, b = fused["wx"], fused["wh"], fused["b"]

    h0_pad = jnp.pad(h0.astype(jnp.float32), ((0, 0), (0, Hp - H)))

    cost = pl.CostEstimate(
        flops=T * (2 * B * (K + Hp) * 4 * Hp + 10 * B * Hp),
        transcendentals=T * 3 * B * Hp,
        bytes_accessed=4 * (xs.size + h0_pad.size + wx.size + wh.size + b.size + B * Hp),
    )

    out = pl.pallas_call(
        gru_seq_kernel,
        out_shape=jax.ShapeDtypeStruct((B, Hp), jnp.float32),
        grid=(T,),
        in_specs=[
            pl.BlockSpec((1, B, K), lambda t: (t, 0, 0)),      # x_t streamed per step
            pl.BlockSpec((B, Hp), lambda t: (0, 0)),           # h0: constant block
            pl.BlockSpec((K, 4 * Hp), lambda t: (0, 0)),       # wx resident in VMEM
            pl.BlockSpec((Hp, 4 * Hp), lambda t: (0, 0)),      # wh resident in VMEM
            pl.BlockSpec((1, 4 * Hp), lambda t: (0, 0)),       # bias resident
        ],
        out_specs=pl.BlockSpec((B, Hp), lambda t: (0, 0)),
        scratch_shapes=[pltpu.VMEM((B, Hp), jnp.float32)],     # carried hidden state
        compiler_params=pltpu.CompilerParams(
            dimension_semantics=("arbitrary",)),               # sequential recurrence
        cost_estimate=cost,
    )(xs.astype(jnp.float32), h0_pad, wx, wh, b)
    return out[:, :H].astype(h0.dtype)


# ----------------------------------------------------------------------------
# Reference + init
# ----------------------------------------------------------------------------
def init_linear(key, out_features, in_features):
    # Deterministic init mimicking nn.Linear's uniform(-1/sqrt(fan_in), ...).
    k_w, k_b = jax.random.split(key)
    bound = 1.0 / jnp.sqrt(jnp.float32(in_features))
    W = jax.random.uniform(k_w, (out_features, in_features), jnp.float32, -bound, bound)
    b = jax.random.uniform(k_b, (out_features,), jnp.float32, -bound, bound)
    return W, b


def gru_cell_ref(x, h, params):
    def lin(name, v):
        W, b = params[name]
        return v @ W.T + b
    r = jax.nn.sigmoid(lin("ir", x) + lin("hr", h))
    z = jax.nn.sigmoid(lin("iz", x) + lin("iz", h))     # quirk: iz on both
    n = jnp.tanh(lin("in", x) + r * lin("hn", h))
    return n - z * (n - h)


if __name__ == "__main__":
    input_size = 32
    hidden_size = 32   # must equal input_size (reference applies iz_layer to hidden)
    batch = 2
    seq_len = 8

    key = jax.random.PRNGKey(0)
    keys = jax.random.split(key, 9)
    params = {
        "ir": init_linear(keys[0], hidden_size, input_size),
        "hr": init_linear(keys[1], hidden_size, hidden_size),
        "iz": init_linear(keys[2], hidden_size, input_size),
        "hz": init_linear(keys[3], hidden_size, hidden_size),  # unused (as in reference)
        "in": init_linear(keys[4], hidden_size, input_size),
        "hn": init_linear(keys[5], hidden_size, hidden_size),
    }
    fused = prepare_gru_params(params, input_size, hidden_size)

    x = jax.random.normal(keys[6], (batch, input_size), jnp.float32)
    h = jax.random.normal(keys[7], (batch, hidden_size), jnp.float32)

    # Single-step kernel (matches the module's forward).
    out = gru_cell(x, h, fused)
    jax.block_until_ready(out)
    ref = gru_cell_ref(x, h, params)
    assert out.shape == (batch, hidden_size)
    assert jnp.allclose(out, ref, atol=1e-5, rtol=1e-5), float(jnp.max(jnp.abs(out - ref)))

    # Weight-resident in-kernel time loop (recurrent use of the same cell).
    xs = jax.random.normal(keys[8], (seq_len, batch, input_size), jnp.float32)
    out_seq = gru_sequence(xs, h, fused)
    jax.block_until_ready(out_seq)
    h_ref = h
    for t in range(seq_len):
        h_ref = gru_cell_ref(xs[t], h_ref, params)
    assert out_seq.shape == (batch, hidden_size)
    assert jnp.allclose(out_seq, h_ref, atol=1e-4, rtol=1e-4), \
        float(jnp.max(jnp.abs(out_seq - h_ref)))

    print("KERNEL_OK")
</pallas_src>

<mosaic_0001>
module attributes {stable_mosaic.version = 11 : i64} {
  func.func @gru_cell_kernel(%arg0: memref<2x160xf32, #tpu.memory_space<vmem>>, %arg1: memref<160x512xf32, #tpu.memory_space<vmem>>, %arg2: memref<1x512xf32, #tpu.memory_space<vmem>>, %arg3: memref<2x128xf32, #tpu.memory_space<vmem>>) attributes {dimension_semantics = [], scalar_prefetch = 0 : i64, scratch_operands = 0 : i64, tpu.core_type = #tpu.core_type<tc>} {
    %c0 = arith.constant 0 : index
    %c0_0 = arith.constant 0 : index
    %0 = vector.load %arg0[%c0, %c0_0] : memref<2x160xf32, #tpu.memory_space<vmem>>, vector<2x160xf32>
    %1 = vector.extract_strided_slice %0 {offsets = [0, 0], sizes = [2, 128], strides = [1, 1]} : vector<2x160xf32> to vector<2x128xf32>
    %c0_1 = arith.constant 0 : index
    %c0_2 = arith.constant 0 : index
    %2 = vector.load %arg1[%c0_1, %c0_2] : memref<160x512xf32, #tpu.memory_space<vmem>>, vector<160x512xf32>
    %cst = arith.constant dense<0.000000e+00> : vector<2x512xf32>
    %3 = tpu.matmul %0, %2, %cst {dimension_numbers = #tpu.dot_dimension_numbers<[1], [0], [0], [1], [0, 0, 1, 1], [], []>} : vector<2x160xf32>, vector<160x512xf32>, vector<2x512xf32> -> vector<2x512xf32>
    %c0_3 = arith.constant 0 : index
    %c0_4 = arith.constant 0 : index
    %4 = vector.load %arg2[%c0_3, %c0_4] : memref<1x512xf32, #tpu.memory_space<vmem>>, vector<1x512xf32>
    %5 = vector.broadcast %4 : vector<1x512xf32> to vector<2x512xf32>
    %6 = arith.addf %3, %5 : vector<2x512xf32>
    %7 = vector.extract_strided_slice %6 {offsets = [0, 0], sizes = [2, 128], strides = [1, 1]} : vector<2x512xf32> to vector<2x128xf32>
    %8 = arith.negf %7 : vector<2x128xf32>
    %9 = math.exp %8 : vector<2x128xf32>
    %cst_5 = arith.constant 1.000000e+00 : f32
    %10 = vector.broadcast %cst_5 : f32 to vector<2x128xf32>
    %11 = arith.addf %10, %9 : vector<2x128xf32>
    %12 = arith.divf %10, %11 : vector<2x128xf32>
    %13 = vector.extract_strided_slice %6 {offsets = [0, 128], sizes = [2, 128], strides = [1, 1]} : vector<2x512xf32> to vector<2x128xf32>
    %14 = arith.negf %13 : vector<2x128xf32>
    %15 = math.exp %14 : vector<2x128xf32>
    %cst_6 = arith.constant 1.000000e+00 : f32
    %16 = vector.broadcast %cst_6 : f32 to vector<2x128xf32>
    %17 = arith.addf %16, %15 : vector<2x128xf32>
    %18 = arith.divf %16, %17 : vector<2x128xf32>
    %19 = vector.extract_strided_slice %6 {offsets = [0, 256], sizes = [2, 128], strides = [1, 1]} : vector<2x512xf32> to vector<2x128xf32>
    %20 = vector.extract_strided_slice %6 {offsets = [0, 384], sizes = [2, 128], strides = [1, 1]} : vector<2x512xf32> to vector<2x128xf32>
    %21 = arith.mulf %12, %20 : vector<2x128xf32>
    %22 = arith.addf %19, %21 : vector<2x128xf32>
    %23 = math.tanh %22 : vector<2x128xf32>
    %24 = arith.subf %23, %1 : vector<2x128xf32>
    %25 = arith.mulf %18, %24 : vector<2x128xf32>
    %26 = arith.subf %23, %25 : vector<2x128xf32>
    %c0_7 = arith.constant 0 : index
    %c0_8 = arith.constant 0 : index
    %27 = vector.load %arg3[%c0_7, %c0_8] : memref<2x128xf32, #tpu.memory_space<vmem>>, vector<2x128xf32>
    tpu.vector_store %arg3[%c0_7, %c0_8], %26 {strides = array<i32>} : memref<2x128xf32, #tpu.memory_space<vmem>>, vector<2x128xf32>,
    return
  }
}

</mosaic_0001>

<llo_original>
// kernel: tpu_custom_call.1
$region0: #{tpu_custom_call.1}
  #allocation0 [shape = 'u32[]', space=smem, size = 0x4, offset = 0x4, fixed_abs, tag = 'smem constant byte address 0x4 - core index']
  #allocation1 [shape = 'u32[72,128]{1,0:T(1,128)}', space=vmem, size = 0x9000, scoped, tag = 'internal scratch']
  %s0 = inlined_call_operand.hbm [shape: f32[2,160], index: 0, kind: input, shape index: {}]
  %s1 = inlined_call_operand.hbm [shape: f32[160,512], index: 1, kind: input, shape index: {}]
  %s2 = inlined_call_operand.hbm [shape: f32[1,512], index: 2, kind: input, shape index: {}]
  %s3 = inlined_call_operand.hbm [shape: f32[2,128], index: 3, kind: output, shape index: {}]
  %s4 = sld [smem:[#allocation0]]
  $region34: #{tpu_custom_call.1} parent=0
    _
  %s6 = ssub.s32 1, %s4
  %s7 = scalar_select 0, %s6, %s4
  $region1: #{tpu_custom_call.1} parent=0
    #allocation2 [shape = 'u8[2048]{0}', space=vmem, size = 0x800, scoped, tag = 'input window, operand 0, single buffered']
    #allocation3 [shape = 's32[1]{0}', space=sflag, size = 0x4, scoped, tag = 'scoped memory for tpu_custom_call.1']
    #allocation4 [shape = 's32[1]{0}', space=sflag, size = 0x4, scoped, tag = 'scoped memory for tpu_custom_call.1']
    #allocation5 [shape = 'u8[327680]{0}', space=vmem, size = 0x50000, scoped, tag = 'input window, operand 1, single buffered']
    #allocation6 [shape = 's32[1]{0}', space=sflag, size = 0x4, scoped, tag = 'scoped memory for tpu_custom_call.1']
    #allocation7 [shape = 'u8[2048]{0}', space=vmem, size = 0x800, scoped, tag = 'input window, operand 2, single buffered']
    #allocation8 [shape = 'u8[1024]{0}', space=vmem, size = 0x400, scoped, tag = 'output window, operand 0, single buffered']
    %8 = vsyncpa [#allocation3], 0
    %9 = vsyncpa [#allocation6], 0
    %10 = vsyncpa [#allocation4], 0
    // Predicated region
    $region2: #{tpu_custom_call.1} parent=1 // pred_check
      _
    $region3: #{tpu_custom_call.1} parent=1 // pred_check_branch
      %12 = sbr.rel (0) target = $region5
    $region4: #{tpu_custom_call.1} parent=1 // pred_region
      %14 = vsyncadd [#allocation3], 0
      %s16 = sshll.u32 %s0, 4
      %s17 = int_to_ptr.hbm [resolvable:$true] %s16
      %s18 = sshll.u32 [#allocation2], 4
      %s19 = int_to_ptr.vmem [resolvable:$true] %s18
      %21 = dma.hbm_to_vmem [thread:$0]  %s17, 64, %s19, [#allocation3]
    $region5: #{tpu_custom_call.1} parent=1 // pred_fallthru
      _
    // Predicated region
    $region6: #{tpu_custom_call.1} parent=1 // pred_check
      _
    $region7: #{tpu_custom_call.1} parent=1 // pred_check_branch
      %23 = sbr.rel (0) target = $region9
    $region8: #{tpu_custom_call.1} parent=1 // pred_region
      %25 = vsyncadd [#allocation6], 0
      %s26 = sshll.u32 %s1, 4
      %s27 = int_to_ptr.hbm [resolvable:$true] %s26
      %s28 = sshll.u32 [#allocation5], 4
      %s29 = int_to_ptr.vmem [resolvable:$true] %s28
      %34 = dma.hbm_to_vmem [thread:$0]  %s27, 10240, %s29, [#allocation6], 512, 512, 32
    $region9: #{tpu_custom_call.1} parent=1 // pred_fallthru
      _
    // Predicated region
    $region10: #{tpu_custom_call.1} parent=1 // pred_check
      _
    $region11: #{tpu_custom_call.1} parent=1 // pred_check_branch
      %36 = sbr.rel (0) target = $region13
    $region12: #{tpu_custom_call.1} parent=1 // pred_region
      %38 = vsyncadd [#allocation6], 0
      %s40 = sshll.u32 %s2, 4
      %s41 = int_to_ptr.hbm [resolvable:$true] %s40
      %s42 = sshll.u32 [#allocation7], 4
      %s43 = int_to_ptr.vmem [resolvable:$true] %s42
      %45 = dma.hbm_to_vmem [thread:$0]  %s41, 64, %s43, [#allocation6]
    $region13: #{tpu_custom_call.1} parent=1 // pred_fallthru
      _
    // Predicated region
    $region14: #{tpu_custom_call.1} parent=1 // pred_check
      _
    $region15: #{tpu_custom_call.1} parent=1 // pred_check_branch
      %47 = sbr.rel (0) target = $region17
    $region16: #{tpu_custom_call.1} parent=1 // pred_region
      %49 = dma.done [#allocation3], 64
    $region17: #{tpu_custom_call.1} parent=1 // pred_fallthru
      _
    // Predicated region
    $region18: #{tpu_custom_call.1} parent=1 // pred_check
      _
    $region19: #{tpu_custom_call.1} parent=1 // pred_check_branch
      %51 = sbr.rel (0) target = $region21
    $region20: #{tpu_custom_call.1} parent=1 // pred_region
      %53 = dma.done [#allocation6], 10240
    $region21: #{tpu_custom_call.1} parent=1 // pred_fallthru
      _
    // Predicated region
    $region22: #{tpu_custom_call.1} parent=1 // pred_check
      _
    $region23: #{tpu_custom_call.1} parent=1 // pred_check_branch
      %55 = sbr.rel (0) target = $region25
    $region24: #{tpu_custom_call.1} parent=1 // pred_region
      %57 = dma.done [#allocation6], 64
    $region25: #{tpu_custom_call.1} parent=1 // pred_fallthru
      _
    %v58 = vld [vmem:[#allocation2] sm:$0xf]
    %v59 = vld [vmem:[#allocation5] sm:$0xff]
    %v60 = vld [vmem:[#allocation5 + $0x8] sm:$0xff]
    %v61 = vld [vmem:[#allocation5 + $0x10] sm:$0xff]
    %v62 = vld [vmem:[#allocation5 + $0x18] sm:$0xff]
    %v63 = vld [vmem:[#allocation5 + $0x20] sm:$0xff]
    %v64 = vld [vmem:[#allocation5 + $0x28] sm:$0xff]
    %v65 = vld [vmem:[#allocation5 + $0x30] sm:$0xff]
    %v66 = vld [vmem:[#allocation5 + $0x38] sm:$0xff]
    %v67 = vld [vmem:[#allocation5 + $0x40] sm:$0xff]
    %v68 = vld [vmem:[#allocation5 + $0x48] sm:$0xff]
    %v69 = vld [vmem:[#allocation5 + $0x50] sm:$0xff]
    %v70 = vld [vmem:[#allocation5 + $0x58] sm:$0xff]
    %v71 = vld [vmem:[#allocation5 + $0x60] sm:$0xff]
    %v72 = vld [vmem:[#allocation5 + $0x68] sm:$0xff]
    %v73 = vld [vmem:[#allocation5 + $0x70] sm:$0xff]
    %v74 = vld [vmem:[#allocation5 + $0x78] sm:$0xff]
    %v75 = vld [vmem:[#allocation5 + $0x80] sm:$0xff]
    %v76 = vld [vmem:[#allocation5 + $0x88] sm:$0xff]
    %v77 = vld [vmem:[#allocation5 + $0x90] sm:$0xff]
    %v78 = vld [vmem:[#allocation5 + $0x98] sm:$0xff]
    %v79 = vld [vmem:[#allocation5 + $0xa0] sm:$0xff]
    %v80 = vld [vmem:[#allocation5 + $0xa8] sm:$0xff]
    %v81 = vld [vmem:[#allocation5 + $0xb0] sm:$0xff]
    %v82 = vld [vmem:[#allocation5 + $0xb8] sm:$0xff]
    %v83 = vld [vmem:[#allocation5 + $0xc0] sm:$0xff]
    %v84 = vld [vmem:[#allocation5 + $0xc8] sm:$0xff]
    %v85 = vld [vmem:[#allocation5 + $0xd0] sm:$0xff]
    %v86 = vld [vmem:[#allocation5 + $0xd8] sm:$0xff]
    %v87 = vld [vmem:[#allocation5 + $0xe0] sm:$0xff]
    %v88 = vld [vmem:[#allocation5 + $0xe8] sm:$0xff]
    %v89 = vld [vmem:[#allocation5 + $0xf0] sm:$0xff]
    %v90 = vld [vmem:[#allocation5 + $0xf8] sm:$0xff]
    %v91 = vld [vmem:[#allocation5 + $0x100] sm:$0xff]
    %v92 = vld [vmem:[#allocation5 + $0x108] sm:$0xff]
    %v93 = vld [vmem:[#allocation5 + $0x110] sm:$0xff]
    %v94 = vld [vmem:[#allocation5 + $0x118] sm:$0xff]
    %v95 = vld [vmem:[#allocation5 + $0x120] sm:$0xff]
    %v96 = vld [vmem:[#allocation5 + $0x128] sm:$0xff]
    %v97 = vld [vmem:[#allocation5 + $0x130] sm:$0xff]
    %v98 = vld [vmem:[#allocation5 + $0x138] sm:$0xff]
    %v99 = vld [vmem:[#allocation5 + $0x140] sm:$0xff]
    %v100 = vld [vmem:[#allocation5 + $0x148] sm:$0xff]
    %v101 = vld [vmem:[#allocation5 + $0x150] sm:$0xff]
    %v102 = vld [vmem:[#allocation5 + $0x158] sm:$0xff]
    %v103 = vld [vmem:[#allocation5 + $0x160] sm:$0xff]
    %v104 = vld [vmem:[#allocation5 + $0x168] sm:$0xff]
    %v105 = vld [vmem:[#allocation5 + $0x170] sm:$0xff]
    %v106 = vld [vmem:[#allocation5 + $0x178] sm:$0xff]
    %v107 = vld [vmem:[#allocation5 + $0x180] sm:$0xff]
    %v108 = vld [vmem:[#allocation5 + $0x188] sm:$0xff]
    %v109 = vld [vmem:[#allocation5 + $0x190] sm:$0xff]
    %v110 = vld [vmem:[#allocation5 + $0x198] sm:$0xff]
    %v111 = vld [vmem:[#allocation5 + $0x1a0] sm:$0xff]
    %v112 = vld [vmem:[#allocation5 + $0x1a8] sm:$0xff]
    %v113 = vld [vmem:[#allocation5 + $0x1b0] sm:$0xff]
    %v114 = vld [vmem:[#allocation5 + $0x1b8] sm:$0xff]
    %v115 = vld [vmem:[#allocation5 + $0x1c0] sm:$0xff]
    %v116 = vld [vmem:[#allocation5 + $0x1c8] sm:$0xff]
    %v117 = vld [vmem:[#allocation5 + $0x1d0] sm:$0xff]
    %v118 = vld [vmem:[#allocation5 + $0x1d8] sm:$0xff]
    %v119 = vld [vmem:[#allocation5 + $0x1e0] sm:$0xff]
    %v120 = vld [vmem:[#allocation5 + $0x1e8] sm:$0xff]
    %v121 = vld [vmem:[#allocation5 + $0x1f0] sm:$0xff]
    %v122 = vld [vmem:[#allocation5 + $0x1f8] sm:$0xff]
    %v123 = vld [vmem:[#allocation5 + $0x200] sm:$0xff]
    %v124 = vld [vmem:[#allocation5 + $0x208] sm:$0xff]
    %v125 = vld [vmem:[#allocation5 + $0x210] sm:$0xff]
    %v126 = vld [vmem:[#allocation5 + $0x218] sm:$0xff]
    %v127 = vld [vmem:[#allocation5 + $0x220] sm:$0xff]
    %v128 = vld [vmem:[#allocation5 + $0x228] sm:$0xff]
    %v129 = vld [vmem:[#allocation5 + $0x230] sm:$0xff]
    %v130 = vld [vmem:[#allocation5 + $0x238] sm:$0xff]
    %v131 = vld [vmem:[#allocation5 + $0x240] sm:$0xff]
    %v132 = vld [vmem:[#allocation5 + $0x248] sm:$0xff]
    %v133 = vld [vmem:[#allocation5 + $0x250] sm:$0xff]
    %v134 = vld [vmem:[#allocation5 + $0x258] sm:$0xff]
    %v135 = vld [vmem:[#allocation5 + $0x260] sm:$0xff]
    %v136 = vld [vmem:[#allocation5 + $0x268] sm:$0xff]
    %v137 = vld [vmem:[#allocation5 + $0x270] sm:$0xff]
    %v138 = vld [vmem:[#allocation5 + $0x278] sm:$0xff]
    %v139 = vld [vmem:[#allocation7] sm:$0xf]
    %v141 = vperm.slane %v139, 0
    %v142 = vperm.slane %v139, 1
    %v143 = vperm.slane %v139, 2
    %v144 = vperm.slane %v139, 3
    %150 = vst [vmem:[#allocation1] ss:$4 sm:$0xff] %v58
    %v151 = vld.sshfl [vmem:[#allocation1] sm:$0xff pattern:$0x73625140]
    %v152 = vld.sshfl [vmem:[#allocation1 + $0x8] sm:$0xff pattern:$0x73625140]
    %vm154 = vcmask 261120
    %v155 = vsel %vm154, %v152, 0
    %157 = vmatpush.msra.mxu0 %v119
    %158 = vmatpush.msra.mxu0 %v115
    %159 = vmatpush.msra.mxu0 %v111
    %160 = vmatpush.msra.mxu0 %v107
    %161 = vmatpush.msra.mxu0 %v103
    %162 = vmatpush.msra.mxu0 %v99
    %163 = vmatpush.msra.mxu0 %v95
    %164 = vmatpush.msra.mxu0 %v91
    %165 = vmatpush.msra.mxu0 %v87
    %166 = vmatpush.msra.mxu0 %v83
    %167 = vmatpush.msra.mxu0 %v79
    %168 = vmatpush.msra.mxu0 %v75
    %169 = vmatpush.msra.mxu0 %v71
    %170 = vmatpush.msra.mxu0 %v67
    %171 = vmatpush.msra.mxu0 %v63
    %172 = vmatpush.msra.mxu0 %v59
    %173 = vmatmul.f32.gmra.mxu0 %v151
    %v174 = vpop.f32.mrf.mxu0
    %v175 = vadd.f32 %v141, %v174
    %176 = vdwg.mxu0
    %177 = vmatpush.msra.mxu0 0.0
    %178 = vmatpush.msra.mxu0 0.0
    %179 = vmatpush.msra.mxu0 0.0
    %180 = vmatpush.msra.mxu0 0.0
    %181 = vmatpush.msra.mxu0 0.0
    %182 = vmatpush.msra.mxu0 0.0
    %183 = vmatpush.msra.mxu0 0.0
    %184 = vmatpush.msra.mxu0 0.0
    %185 = vmatpush.msra.mxu0 0.0
    %186 = vmatpush.msra.mxu0 0.0
    %187 = vmatpush.msra.mxu0 0.0
    %188 = vmatpush.msra.mxu0 0.0
    %189 = vmatpush.msra.mxu0 %v135
    %190 = vmatpush.msra.mxu0 %v131
    %191 = vmatpush.msra.mxu0 %v127
    %192 = vmatpush.msra.mxu0 %v123
    %193 = vmatmul.f32.gmra.mxu0 %v155
    %v194 = vpop.f32.mrf.mxu0
    %v195 = vadd.f32 %v175, %v194
    %196 = vdwg.mxu0
    %197 = vmatpush.msra.mxu0 %v120
    %198 = vmatpush.msra.mxu0 %v116
    %199 = vmatpush.msra.mxu0 %v112
    %200 = vmatpush.msra.mxu0 %v108
    %201 = vmatpush.msra.mxu0 %v104
    %202 = vmatpush.msra.mxu0 %v100
    %203 = vmatpush.msra.mxu0 %v96
    %204 = vmatpush.msra.mxu0 %v92
    %205 = vmatpush.msra.mxu0 %v88
    %206 = vmatpush.msra.mxu0 %v84
    %207 = vmatpush.msra.mxu0 %v80
    %208 = vmatpush.msra.mxu0 %v76
    %209 = vmatpush.msra.mxu0 %v72
    %210 = vmatpush.msra.mxu0 %v68
    %211 = vmatpush.msra.mxu0 %v64
    %212 = vmatpush.msra.mxu0 %v60
    %213 = vmatmul.f32.gmra.mxu0 %v151
    %v214 = vpop.f32.mrf.mxu0
    %v215 = vadd.f32 %v142, %v214
    %216 = vdwg.mxu0
    %217 = vmatpush.msra.mxu0 0.0
    %218 = vmatpush.msra.mxu0 0.0
    %219 = vmatpush.msra.mxu0 0.0
    %220 = vmatpush.msra.mxu0 0.0
    %221 = vmatpush.msra.mxu0 0.0
    %222 = vmatpush.msra.mxu0 0.0
    %223 = vmatpush.msra.mxu0 0.0
    %224 = vmatpush.msra.mxu0 0.0
    %225 = vmatpush.msra.mxu0 0.0
    %226 = vmatpush.msra.mxu0 0.0
    %227 = vmatpush.msra.mxu0 0.0
    %228 = vmatpush.msra.mxu0 0.0
    %229 = vmatpush.msra.mxu0 %v136
    %230 = vmatpush.msra.mxu0 %v132
    %231 = vmatpush.msra.mxu0 %v128
    %232 = vmatpush.msra.mxu0 %v124
    %233 = vmatmul.f32.gmra.mxu0 %v155
    %v234 = vpop.f32.mrf.mxu0
    %v235 = vadd.f32 %v215, %v234
    %236 = vdwg.mxu0
    %237 = vmatpush.msra.mxu0 %v121
    %238 = vmatpush.msra.mxu0 %v117
    %239 = vmatpush.msra.mxu0 %v113
    %240 = vmatpush.msra.mxu0 %v109
    %241 = vmatpush.msra.mxu0 %v105
    %242 = vmatpush.msra.mxu0 %v101
    %243 = vmatpush.msra.mxu0 %v97
    %244 = vmatpush.msra.mxu0 %v93
    %245 = vmatpush.msra.mxu0 %v89
    %246 = vmatpush.msra.mxu0 %v85
    %247 = vmatpush.msra.mxu0 %v81
    %248 = vmatpush.msra.mxu0 %v77
    %249 = vmatpush.msra.mxu0 %v73
    %250 = vmatpush.msra.mxu0 %v69
    %251 = vmatpush.msra.mxu0 %v65
    %252 = vmatpush.msra.mxu0 %v61
    %253 = vmatmul.f32.gmra.mxu0 %v151
    %v254 = vpop.f32.mrf.mxu0
    %v255 = vadd.f32 %v143, %v254
    %256 = vdwg.mxu0
    %257 = vmatpush.msra.mxu0 0.0
    %258 = vmatpush.msra.mxu0 0.0
    %259 = vmatpush.msra.mxu0 0.0
    %260 = vmatpush.msra.mxu0 0.0
    %261 = vmatpush.msra.mxu0 0.0
    %262 = vmatpush.msra.mxu0 0.0
    %263 = vmatpush.msra.mxu0 0.0
    %264 = vmatpush.msra.mxu0 0.0
    %265 = vmatpush.msra.mxu0 0.0
    %266 = vmatpush.msra.mxu0 0.0
    %267 = vmatpush.msra.mxu0 0.0
    %268 = vmatpush.msra.mxu0 0.0
    %269 = vmatpush.msra.mxu0 %v137
    %270 = vmatpush.msra.mxu0 %v133
    %271 = vmatpush.msra.mxu0 %v129
    %272 = vmatpush.msra.mxu0 %v125
    %273 = vmatmul.f32.gmra.mxu0 %v155
    %v274 = vpop.f32.mrf.mxu0
    %v275 = vadd.f32 %v255, %v274
    %276 = vdwg.mxu0
    %277 = vmatpush.msra.mxu0 %v122
    %278 = vmatpush.msra.mxu0 %v118
    %279 = vmatpush.msra.mxu0 %v114
    %280 = vmatpush.msra.mxu0 %v110
    %281 = vmatpush.msra.mxu0 %v106
    %282 = vmatpush.msra.mxu0 %v102
    %283 = vmatpush.msra.mxu0 %v98
    %284 = vmatpush.msra.mxu0 %v94
    %285 = vmatpush.msra.mxu0 %v90
    %286 = vmatpush.msra.mxu0 %v86
    %287 = vmatpush.msra.mxu0 %v82
    %288 = vmatpush.msra.mxu0 %v78
    %289 = vmatpush.msra.mxu0 %v74
    %290 = vmatpush.msra.mxu0 %v70
    %291 = vmatpush.msra.mxu0 %v66
    %292 = vmatpush.msra.mxu0 %v62
    %293 = vmatmul.f32.gmra.mxu0 %v151
    %v294 = vpop.f32.mrf.mxu0
    %v295 = vadd.f32 %v144, %v294
    %296 = vdwg.mxu0
    %297 = vmatpush.msra.mxu0 0.0
    %298 = vmatpush.msra.mxu0 0.0
    %299 = vmatpush.msra.mxu0 0.0
    %300 = vmatpush.msra.mxu0 0.0
    %301 = vmatpush.msra.mxu0 0.0
    %302 = vmatpush.msra.mxu0 0.0
    %303 = vmatpush.msra.mxu0 0.0
    %304 = vmatpush.msra.mxu0 0.0
    %305 = vmatpush.msra.mxu0 0.0
    %306 = vmatpush.msra.mxu0 0.0
    %307 = vmatpush.msra.mxu0 0.0
    %308 = vmatpush.msra.mxu0 0.0
    %309 = vmatpush.msra.mxu0 %v138
    %310 = vmatpush.msra.mxu0 %v134
    %311 = vmatpush.msra.mxu0 %v130
    %312 = vmatpush.msra.mxu0 %v126
    %313 = vmatmul.f32.gmra.mxu0 %v155
    %v314 = vpop.f32.mrf.mxu0
    %v315 = vadd.f32 %v295, %v314
    %316 = vdwg.mxu0
    %v317 = vxor.u32 %v195, 2147483648
    %v318 = vmul.f32 %v317, 1.442695
    %v319 = vpow.pop %v318
    %v320 = vadd.f32 %v319, 1.0
    %v321 = vrcp.pop %v320
    %v322 = vmul.f32 %v320, %v321
    %v323 = vsub.f32 1.0, %v322
    %v324 = vmul.f32 %v321, %v323
    %v325 = vadd.f32 %v321, %v324
    %vm326 = vweird.f32 %v320
    %vm327 = vweird.f32 %v321
    %vm328 = vmor %vm326, %vm327
    %v329 = vsel %vm328, %v321, %v325
    %v330 = vand.u32 2147483647, %v320
    %vm331 = vcmp.eq.f32.partialorder %v330, 8.507059e+37
    %v332 = vand.u32 %v320, 2147483648
    %v333 = vor.u32 1.1754944e-38, %v332
    %v334 = vsel %vm331, %v333, %v329
    %v335 = vmul.f32 1.0, %v334
    %v336 = vxor.u32 %v235, 2147483648
    %v337 = vmul.f32 %v336, 1.442695
    %v338 = vpow.pop %v337
    %v339 = vadd.f32 %v338, 1.0
    %v340 = vrcp.pop %v339
    %v341 = vmul.f32 %v339, %v340
    %v342 = vsub.f32 1.0, %v341
    %v343 = vmul.f32 %v340, %v342
    %v344 = vadd.f32 %v340, %v343
    %vm345 = vweird.f32 %v339
    %vm346 = vweird.f32 %v340
    %vm347 = vmor %vm345, %vm346
    %v348 = vsel %vm347, %v340, %v344
    %v349 = vand.u32 2147483647, %v339
    %vm350 = vcmp.eq.f32.partialorder %v349, 8.507059e+37
    %v351 = vand.u32 %v339, 2147483648
    %v352 = vor.u32 1.1754944e-38, %v351
    %v353 = vsel %vm350, %v352, %v348
    %v354 = vmul.f32 1.0, %v353
    %v355 = vmul.f32 %v335, %v315
    %v356 = vadd.f32 %v275, %v355
    %v357 = vtanh.pop %v356
    %v358 = vsub.f32 %v357, %v58
    %v359 = vmul.f32 %v354, %v358
    %v360 = vsub.f32 %v357, %v359
    %361 = vst [vmem:[#allocation8] sm:$0x3] %v360
    // Predicated region
    $region26: #{tpu_custom_call.1} parent=1 // pred_check
      _
    $region27: #{tpu_custom_call.1} parent=1 // pred_check_branch
      %363 = sbr.rel (0) target = $region29
    $region28: #{tpu_custom_call.1} parent=1 // pred_region
      %365 = vsyncadd [#allocation4], 0
      %s367 = sshll.u32 [#allocation8], 4
      %s368 = int_to_ptr.vmem [resolvable:$true] %s367
      %s369 = sshll.u32 %s3, 4
      %s370 = int_to_ptr.hbm [resolvable:$true] %s369
      %372 = dma.vmem_to_hbm [thread:$0]  %s368, 32, %s370, [#allocation4]
    $region29: #{tpu_custom_call.1} parent=1 // pred_fallthru
      _
    // Predicated region
    $region30: #{tpu_custom_call.1} parent=1 // pred_check
      _
    $region31: #{tpu_custom_call.1} parent=1 // pred_check_branch
      %374 = sbr.rel (0) target = $region33
    $region32: #{tpu_custom_call.1} parent=1 // pred_region
      %376 = dma.done [#allocation4], 32
    $region33: #{tpu_custom_call.1} parent=1 // pred_fallthru
      _
    %377 = vsyncpa [#allocation3], 1
    %378 = vsyncpa [#allocation6], 1
    %379 = vsyncpa [#allocation4], 1

</llo_original>
